<compile_context>
chip_gen: v6e
topology: v6e:2x2x1
jax: 0.10.0
libtpu: 0.0.40
codegen_flags: <defaults>
</compile_context>

<pallas_src>
import functools

import jax
import jax.numpy as jnp
from jax.experimental import pallas as pl
from jax.experimental.pallas import tpu as pltpu


def _round_up(x, m):
    return ((x + m - 1) // m) * m


# -----------------------------------------------------------------------------
# Fused kernel (one batch block):
#   one-hot gather (MXU) -> im2col via whole-block rolls -> all-window conv as ONE
#   MXU matmul -> bias + ReLU + precomputed validity mask + max-pool -> Linear.
#
#   tok_ref  : (1, bb, L)       int32 token ids for this batch block
#   emb_ref  : (V_pad, E)       bf16 embedding table (zero-padded rows)
#   wc_ref   : (h_max*E, CFp)   bf16 packed conv weights (zero-padded taps/lanes)
#   bc_ref   : (1, CFp)         f32 packed conv bias (zero pad lanes)
#   mask_ref : (L, CFp)         f32 0/1 validity mask per (position, channel)
#   fw_ref   : (CFp, Cp)        bf16 FC weight, transposed + zero padded
#   fb_ref   : (1, Cp)          f32 FC bias (zero pad lanes)
#   o_ref    : (1, bb, Cp)      f32 logits (lane padded)
# -----------------------------------------------------------------------------
def textcnn_fused_kernel(tok_ref, emb_ref, wc_ref, bc_ref, mask_ref, fw_ref, fb_ref,
                         o_ref, *, h_max):
    _, bb, L = tok_ref.shape
    m = bb * L
    v_pad = emb_ref.shape[0]
    cf_pad = wc_ref.shape[1]

    # ---- in-kernel embedding gather: one-hot @ table on the MXU -----------------
    tok = tok_ref[0]                                                   # (bb, L) i32
    vid = jax.lax.broadcasted_iota(jnp.int32, (bb, L, v_pad), 2)
    onehot = (vid == tok[:, :, None]).astype(jnp.bfloat16)             # (bb, L, Vp)
    x = jnp.dot(onehot.reshape(m, v_pad), emb_ref[...],
                preferred_element_type=jnp.float32)                    # (m, E) f32

    # ---- im2col over the flattened (m, E) block via XLU rolls --------------------
    # Row r = b*L + t of `cols` holds concat(x[r], x[r+1], ..., x[r+h_max-1]).
    # Windows that cross a batch boundary are invalid positions and are zeroed by
    # `mask_ref` before the max-pool, so the wrap-around is harmless.
    # (Rolls are done in f32; one cast of `cols` to bf16 feeds the MXU.)
    shifted = [x] + [pltpu.roll(x, shift=m - k, axis=0) for k in range(1, h_max)]
    cols = jnp.concatenate(shifted, axis=-1).astype(jnp.bfloat16)      # (m, h_max*E)

    # ---- all windows' convolutions as ONE MXU matmul + bias + ReLU ---------------
    y = jnp.dot(cols, wc_ref[...], preferred_element_type=jnp.float32)  # (m, CFp)
    y = jnp.maximum(y + bc_ref[...], 0.0)

    # ---- mask invalid sliding positions (precomputed) + max-pool over L ----------
    # Masked entries become 0, which never wins the max since ReLU output >= 0.
    y = y.reshape(bb, L, cf_pad) * mask_ref[...]
    pooled = jnp.max(y, axis=1)                                         # (bb, CFp)

    # ---- final Linear epilogue; lane-dense (C padded to 128) output --------------
    logits = jnp.dot(pooled.astype(jnp.bfloat16), fw_ref[...],
                     preferred_element_type=jnp.float32) + fb_ref[...]
    o_ref[...] = logits[None]


# -----------------------------------------------------------------------------
# One-time packing of torch-layout parameters into the fused kernel's layout.
# -----------------------------------------------------------------------------
def prepare_params(params, max_seq_len):
    emb = params["emb"].astype(jnp.float32)
    V, E = int(emb.shape[0]), int(emb.shape[1])
    V_pad = _round_up(V, 128)
    emb_p = jnp.zeros((V_pad, E), jnp.float32).at[:V].set(emb)

    window_sizes = tuple(int(w.shape[2]) for w in params["conv_w"])
    F = int(params["conv_w"][0].shape[0])
    h_max = max(window_sizes)
    # If any window exceeds the sequence length, pooled features would silently be 0.
    assert max_seq_len >= h_max, "window size exceeds max_seq_len"

    CF = len(window_sizes) * F
    CF_pad = _round_up(CF, 128)
    C = int(params["fc_b"].shape[0])
    C_pad = _round_up(C, 128)

    wc = jnp.zeros((h_max * E, CF_pad), jnp.float32)
    bc = jnp.zeros((1, CF_pad), jnp.float32)
    mask = jnp.zeros((max_seq_len, CF_pad), jnp.float32)
    pos = jnp.arange(max_seq_len)[:, None]
    for i, (w, b, h) in enumerate(zip(params["conv_w"], params["conv_b"], window_sizes)):
        # torch Conv1d weight (F, E, h) -> im2col layout (h*E, F), placed at rows
        # [0, h*E) (remaining taps stay zero) and lanes [i*F, (i+1)*F).
        w_kef = jnp.transpose(w, (2, 1, 0)).reshape(h * E, F).astype(jnp.float32)
        wc = wc.at[: h * E, i * F:(i + 1) * F].set(w_kef)
        bc = bc.at[0, i * F:(i + 1) * F].set(b.astype(jnp.float32))
        valid = (pos < (max_seq_len - h + 1)).astype(jnp.float32)       # (L, 1)
        mask = mask.at[:, i * F:(i + 1) * F].set(
            jnp.broadcast_to(valid, (max_seq_len, F)))

    fw = jnp.zeros((CF_pad, C_pad), jnp.float32)
    fw = fw.at[:CF, :C].set(jnp.transpose(params["fc_w"]).astype(jnp.float32))
    fb = jnp.zeros((1, C_pad), jnp.float32)
    fb = fb.at[0, :C].set(params["fc_b"].astype(jnp.float32))

    return {
        "emb": emb_p.astype(jnp.bfloat16),   # MXU operand (gather table)
        "wc": wc.astype(jnp.bfloat16),       # MXU operand
        "bc": bc,
        "mask": mask,
        "fw": fw.astype(jnp.bfloat16),       # MXU operand
        "fb": fb,
        "window_sizes": window_sizes,
        "num_classes": C,
        "max_seq_len": max_seq_len,
    }


def _pick_batch_block(batch, seq_len, per_row_bytes, budget=16 << 20):
    """Largest batch block (divisor of `batch`) whose in-kernel intermediates fit
    the VMEM budget; keep a 2-way megacore split only when each half still feeds
    the MXU with >= 256 rows (otherwise single-TC v5e/v6e just pays grid overhead
    and v7x's second core gains nothing)."""
    cap = max(1, budget // max(per_row_bytes, 1))
    bb = 1
    for d in range(1, batch + 1):
        if batch % d == 0 and d <= cap:
            bb = d
    if bb == batch and batch % 2 == 0 and (batch // 2) * seq_len >= 256:
        bb = batch // 2
    return bb


# -----------------------------------------------------------------------------
# Full TextCNN forward: ONE fused pallas_call (gather + conv + pool + fc).
# -----------------------------------------------------------------------------
def textcnn_forward(tokens, prep):
    B, L = tokens.shape
    assert L == prep["max_seq_len"]
    V_pad, E = (int(s) for s in prep["emb"].shape)
    K, CF_pad = (int(s) for s in prep["wc"].shape)
    C_pad = int(prep["fw"].shape[1])
    h_max = max(prep["window_sizes"])

    # Rough per-batch-row VMEM footprint of in-kernel intermediates (bytes).
    per_row = L * (
        4                      # tokens (int32)
        + 2 * V_pad            # one-hot (bf16)
        + 4 * E                # gathered embeddings (f32)
        + 4 * h_max * E        # rolled copies / cols (f32)
        + 2 * h_max * E        # cols (bf16 MXU operand)
        + 2 * 4 * CF_pad       # conv activations y + masked copy (f32)
    )
    bb = _pick_batch_block(B, L, per_row)
    nblk = B // bb
    tokens_b = tokens.astype(jnp.int32).reshape(nblk, bb, L)

    weight_bytes = (prep["emb"].size * 2 + prep["wc"].size * 2 + prep["bc"].size * 4
                    + prep["mask"].size * 4 + prep["fw"].size * 2 + prep["fb"].size * 4)
    vmem_limit = int(min(64 << 20,
                         max(32 << 20, 2 * (weight_bytes + bb * per_row) + (2 << 20))))

    flops = (2 * B * L * V_pad * E            # one-hot gather matmul
             + 2 * B * L * (h_max * E) * CF_pad   # all-window conv matmul
             + 2 * B * CF_pad * C_pad)            # final Linear
    bytes_accessed = int(tokens_b.size * 4 + weight_bytes + B * C_pad * 4)
    cost = pl.CostEstimate(flops=int(flops), transcendentals=0,
                           bytes_accessed=bytes_accessed)

    kernel = functools.partial(textcnn_fused_kernel, h_max=h_max)
    out = pl.pallas_call(
        kernel,
        out_shape=jax.ShapeDtypeStruct((nblk, bb, C_pad), jnp.float32),
        grid=(nblk,),
        in_specs=[
            pl.BlockSpec((1, bb, L), lambda i: (i, 0, 0)),      # tokens (per block)
            pl.BlockSpec((V_pad, E), lambda i: (0, 0)),         # embedding table
            pl.BlockSpec((K, CF_pad), lambda i: (0, 0)),        # packed conv weights
            pl.BlockSpec((1, CF_pad), lambda i: (0, 0)),        # conv bias
            pl.BlockSpec((L, CF_pad), lambda i: (0, 0)),        # validity mask
            pl.BlockSpec((CF_pad, C_pad), lambda i: (0, 0)),    # fc weight
            pl.BlockSpec((1, C_pad), lambda i: (0, 0)),         # fc bias
        ],
        out_specs=pl.BlockSpec((1, bb, C_pad), lambda i: (i, 0, 0)),
        compiler_params=pltpu.CompilerParams(
            dimension_semantics=("parallel",),
            vmem_limit_bytes=vmem_limit),
        cost_estimate=cost,
    )(tokens_b, prep["emb"], prep["wc"], prep["bc"], prep["mask"],
      prep["fw"], prep["fb"])

    return out.reshape(B, C_pad)[:, : prep["num_classes"]]


# Pure-JAX reference (f32) for verification.
def textcnn_reference(tokens, params):
    embed = params["emb"][tokens].astype(jnp.float32)        # (B, L, E)
    embed_t = jnp.transpose(embed, (0, 2, 1))                # (B, E, L)
    feats = []
    for w, b in zip(params["conv_w"], params["conv_b"]):
        out = jax.lax.conv_general_dilated(
            embed_t, w, window_strides=(1,), padding="VALID",
            dimension_numbers=("NCH", "OIH", "NCH"),
        )
        out = out + b[None, :, None]
        out = jnp.maximum(out, 0.0)
        feats.append(jnp.max(out, axis=-1))                  # MaxPool1d(L - h + 1)
    feat = jnp.concatenate(feats, axis=1)
    return feat @ params["fc_w"].T + params["fc_b"]


if __name__ == "__main__":
    vocab_size = 100
    embedding_size = 32
    feature_size = 16
    window_sizes = (2, 3, 4)
    max_seq_len = 16
    num_classes = 4
    batch = 2

    key = jax.random.PRNGKey(0)
    k_emb, k_tok, k_fc_w, k_fc_b, *k_convs = jax.random.split(
        key, 4 + 2 * len(window_sizes)
    )

    params = {
        "emb": jax.random.normal(k_emb, (vocab_size, embedding_size), jnp.float32) * 0.1,
        "conv_w": [],
        "conv_b": [],
        "fc_w": jax.random.normal(
            k_fc_w, (num_classes, feature_size * len(window_sizes)), jnp.float32
        ) * 0.1,
        "fc_b": jax.random.normal(k_fc_b, (num_classes,), jnp.float32) * 0.1,
    }
    for i, h in enumerate(window_sizes):
        kw, kb = k_convs[2 * i], k_convs[2 * i + 1]
        # PyTorch Conv1d weight layout: (out_channels, in_channels, kernel_size)
        params["conv_w"].append(
            jax.random.normal(kw, (feature_size, embedding_size, h), jnp.float32) * 0.1
        )
        params["conv_b"].append(
            jax.random.normal(kb, (feature_size,), jnp.float32) * 0.1
        )

    tokens = jax.random.randint(k_tok, (batch, max_seq_len), 0, vocab_size, jnp.int32)

    prep = prepare_params(params, max_seq_len)               # one-time weight packing
    out = jax.block_until_ready(textcnn_forward(tokens, prep))
    ref = jax.block_until_ready(textcnn_reference(tokens, params))

    assert out.shape == (batch, num_classes), out.shape
    # bf16 MXU operands (embedding table, conv/fc weights) -> relaxed tolerance.
    assert jnp.allclose(out, ref, atol=2e-2, rtol=2e-2), (out, ref)
    print("KERNEL_OK")
</pallas_src>

<mosaic_0001>
module attributes {stable_mosaic.version = 11 : i64} {
  func.func @textcnn_fused_kernel(%arg0: i32, %arg1: memref<1x2x16xi32, #tpu.memory_space<vmem>>, %arg2: memref<128x32xbf16, #tpu.memory_space<vmem>>, %arg3: memref<128x128xbf16, #tpu.memory_space<vmem>>, %arg4: memref<1x128xf32, #tpu.memory_space<vmem>>, %arg5: memref<16x128xf32, #tpu.memory_space<vmem>>, %arg6: memref<128x128xbf16, #tpu.memory_space<vmem>>, %arg7: memref<1x128xf32, #tpu.memory_space<vmem>>, %arg8: memref<1x2x128xf32, #tpu.memory_space<vmem>>) attributes {dimension_semantics = [#tpu.dimension_semantics<parallel>], iteration_bounds = array<i64: 1>, scalar_prefetch = 0 : i64, scratch_operands = 0 : i64, tpu.core_type = #tpu.core_type<tc>, window_params = [{transform_indices = @transform_0, window_bounds = array<i64: 1, 2, 16>}, {pipeline_mode = #tpu.pipeline_mode<synchronous>, transform_indices = @transform_1, window_bounds = array<i64: 128, 32>}, {pipeline_mode = #tpu.pipeline_mode<synchronous>, transform_indices = @transform_2, window_bounds = array<i64: 128, 128>}, {pipeline_mode = #tpu.pipeline_mode<synchronous>, transform_indices = @transform_3, window_bounds = array<i64: 1, 128>}, {pipeline_mode = #tpu.pipeline_mode<synchronous>, transform_indices = @transform_4, window_bounds = array<i64: 16, 128>}, {pipeline_mode = #tpu.pipeline_mode<synchronous>, transform_indices = @transform_5, window_bounds = array<i64: 128, 128>}, {pipeline_mode = #tpu.pipeline_mode<synchronous>, transform_indices = @transform_6, window_bounds = array<i64: 1, 128>}, {transform_indices = @transform_7, window_bounds = array<i64: 1, 2, 128>}]} {
    %c0 = arith.constant 0 : index
    %c0_0 = arith.constant 0 : index
    %c0_1 = arith.constant 0 : index
    %0 = vector.load %arg1[%c0, %c0_0, %c0_1] : memref<1x2x16xi32, #tpu.memory_space<vmem>>, vector<1x2x16xi32>
    %1 = vector.shape_cast %0 : vector<1x2x16xi32> to vector<2x16xi32>
    %2 = tpu.iota {dimensions = array<i32: 2>} : vector<2x16x128xi32>
    %3 = vector.shape_cast %1 : vector<2x16xi32> to vector<2x16x1xi32>
    %4 = vector.broadcast %3 : vector<2x16x1xi32> to vector<2x16x128xi32>
    %5 = arith.cmpi eq, %2, %4 : vector<2x16x128xi32>
    %6 = arith.extui %5 : vector<2x16x128xi1> to vector<2x16x128xi32>
    %7 = arith.sitofp %6 : vector<2x16x128xi32> to vector<2x16x128xf32>
    %8 = arith.truncf %7 : vector<2x16x128xf32> to vector<2x16x128xbf16>
    %9 = vector.shape_cast %8 : vector<2x16x128xbf16> to vector<32x128xbf16>
    %c0_2 = arith.constant 0 : index
    %c0_3 = arith.constant 0 : index
    %10 = vector.load %arg2[%c0_2, %c0_3] : memref<128x32xbf16, #tpu.memory_space<vmem>>, vector<128x32xbf16>
    %cst = arith.constant dense<0.000000e+00> : vector<32x32xf32>
    %11 = tpu.matmul %9, %10, %cst {dimension_numbers = #tpu.dot_dimension_numbers<[1], [0], [0], [1], [0, 0, 1, 1], [], []>} : vector<32x128xbf16>, vector<128x32xbf16>, vector<32x32xf32> -> vector<32x32xf32>
    %c31_i32 = arith.constant 31 : i32
    %12 = tpu.dynamic_rotate %11 by %c31_i32 dim 0 : vector<32x32xf32>, i32 -> vector<32x32xf32>
    %c30_i32 = arith.constant 30 : i32
    %13 = tpu.dynamic_rotate %11 by %c30_i32 dim 0 : vector<32x32xf32>, i32 -> vector<32x32xf32>
    %c29_i32 = arith.constant 29 : i32
    %14 = tpu.dynamic_rotate %11 by %c29_i32 dim 0 : vector<32x32xf32>, i32 -> vector<32x32xf32>
    %15 = tpu.concatenate %11, %12, %13, %14 in 1 : vector<32x32xf32>, vector<32x32xf32>, vector<32x32xf32>, vector<32x32xf32> -> vector<32x128xf32>
    %16 = arith.truncf %15 : vector<32x128xf32> to vector<32x128xbf16>
    %c0_4 = arith.constant 0 : index
    %c0_5 = arith.constant 0 : index
    %17 = vector.load %arg3[%c0_4, %c0_5] : memref<128x128xbf16, #tpu.memory_space<vmem>>, vector<128x128xbf16>
    %cst_6 = arith.constant dense<0.000000e+00> : vector<32x128xf32>
    %18 = tpu.matmul %16, %17, %cst_6 {dimension_numbers = #tpu.dot_dimension_numbers<[1], [0], [0], [1], [0, 0, 1, 1], [], []>} : vector<32x128xbf16>, vector<128x128xbf16>, vector<32x128xf32> -> vector<32x128xf32>
    %c0_7 = arith.constant 0 : index
    %c0_8 = arith.constant 0 : index
    %19 = vector.load %arg4[%c0_7, %c0_8] : memref<1x128xf32, #tpu.memory_space<vmem>>, vector<1x128xf32>
    %20 = vector.broadcast %19 : vector<1x128xf32> to vector<32x128xf32>
    %21 = arith.addf %18, %20 : vector<32x128xf32>
    %cst_9 = arith.constant 0.000000e+00 : f32
    %22 = vector.broadcast %cst_9 : f32 to vector<32x128xf32>
    %23 = arith.maximumf %21, %22 : vector<32x128xf32>
    %24 = vector.shape_cast %23 : vector<32x128xf32> to vector<2x16x128xf32>
    %c0_10 = arith.constant 0 : index
    %c0_11 = arith.constant 0 : index
    %25 = vector.load %arg5[%c0_10, %c0_11] : memref<16x128xf32, #tpu.memory_space<vmem>>, vector<16x128xf32>
    %26 = vector.shape_cast %25 : vector<16x128xf32> to vector<1x16x128xf32>
    %27 = vector.broadcast %26 : vector<1x16x128xf32> to vector<2x16x128xf32>
    %28 = arith.mulf %24, %27 : vector<2x16x128xf32>
    %cst_12 = arith.constant dense<0xFF800000> : vector<2x128xf32>
    %29 = vector.multi_reduction <maximumf>, %28, %cst_12 [1] : vector<2x16x128xf32> to vector<2x128xf32>
    %30 = arith.truncf %29 : vector<2x128xf32> to vector<2x128xbf16>
    %c0_13 = arith.constant 0 : index
    %c0_14 = arith.constant 0 : index
    %31 = vector.load %arg6[%c0_13, %c0_14] : memref<128x128xbf16, #tpu.memory_space<vmem>>, vector<128x128xbf16>
    %cst_15 = arith.constant dense<0.000000e+00> : vector<2x128xf32>
    %32 = tpu.matmul %30, %31, %cst_15 {dimension_numbers = #tpu.dot_dimension_numbers<[1], [0], [0], [1], [0, 0, 1, 1], [], []>} : vector<2x128xbf16>, vector<128x128xbf16>, vector<2x128xf32> -> vector<2x128xf32>
    %c0_16 = arith.constant 0 : index
    %c0_17 = arith.constant 0 : index
    %33 = vector.load %arg7[%c0_16, %c0_17] : memref<1x128xf32, #tpu.memory_space<vmem>>, vector<1x128xf32>
    %34 = vector.broadcast %33 : vector<1x128xf32> to vector<2x128xf32>
    %35 = arith.addf %32, %34 : vector<2x128xf32>
    %36 = vector.shape_cast %35 : vector<2x128xf32> to vector<1x2x128xf32>
    %c0_18 = arith.constant 0 : index
    %c0_19 = arith.constant 0 : index
    %c0_20 = arith.constant 0 : index
    %37 = vector.load %arg8[%c0_18, %c0_19, %c0_20] : memref<1x2x128xf32, #tpu.memory_space<vmem>>, vector<1x2x128xf32>
    tpu.vector_store %arg8[%c0_18, %c0_19, %c0_20], %36 {strides = array<i32>} : memref<1x2x128xf32, #tpu.memory_space<vmem>>, vector<1x2x128xf32>,
    return
  }
  func.func @transform_0(%arg0: i32) -> (i32, i32, i32) {
    %c0_i32 = arith.constant 0 : i32
    %c0_i32_0 = arith.constant 0 : i32
    %c0_i32_1 = arith.constant 0 : i32
    return %arg0, %c0_i32, %c0_i32_0 : i32, i32, i32
  }
  func.func @transform_1(%arg0: i32) -> (i32, i32) {
    %c0_i32 = arith.constant 0 : i32
    %c0_i32_0 = arith.constant 0 : i32
    %c0_i32_1 = arith.constant 0 : i32
    return %c0_i32, %c0_i32_0 : i32, i32
  }
  func.func @transform_2(%arg0: i32) -> (i32, i32) {
    %c0_i32 = arith.constant 0 : i32
    %c0_i32_0 = arith.constant 0 : i32
    %c0_i32_1 = arith.constant 0 : i32
    return %c0_i32, %c0_i32_0 : i32, i32
  }
  func.func @transform_3(%arg0: i32) -> (i32, i32) {
    %c0_i32 = arith.constant 0 : i32
    %c0_i32_0 = arith.constant 0 : i32
    %c0_i32_1 = arith.constant 0 : i32
    return %c0_i32, %c0_i32_0 : i32, i32
  }
  func.func @transform_4(%arg0: i32) -> (i32, i32) {
    %c0_i32 = arith.constant 0 : i32
    %c0_i32_0 = arith.constant 0 : i32
    %c0_i32_1 = arith.constant 0 : i32
    return %c0_i32, %c0_i32_0 : i32, i32
  }
  func.func @transform_5(%arg0: i32) -> (i32, i32) {
    %c0_i32 = arith.constant 0 : i32
    %c0_i32_0 = arith.constant 0 : i32
    %c0_i32_1 = arith.constant 0 : i32
    return %c0_i32, %c0_i32_0 : i32, i32
  }
  func.func @transform_6(%arg0: i32) -> (i32, i32) {
    %c0_i32 = arith.constant 0 : i32
    %c0_i32_0 = arith.constant 0 : i32
    %c0_i32_1 = arith.constant 0 : i32
    return %c0_i32, %c0_i32_0 : i32, i32
  }
  func.func @transform_7(%arg0: i32) -> (i32, i32, i32) {
    %c0_i32 = arith.constant 0 : i32
    %c0_i32_0 = arith.constant 0 : i32
    %c0_i32_1 = arith.constant 0 : i32
    return %arg0, %c0_i32, %c0_i32_0 : i32, i32, i32
  }
}

</mosaic_0001>

<llo_original>
// kernel: tpu_custom_call.1
$region0: #{tpu_custom_call.1}
  #allocation0 [shape = 'u32[]', space=smem, size = 0x4, offset = 0x4, fixed_abs, tag = 'smem constant byte address 0x4 - core index']
  #allocation1 [shape = 'u32[144,128]{1,0:T(1,128)}', space=vmem, size = 0x12000, scoped, tag = 'internal scratch']
  %s0 = inlined_call_operand.vmem [shape: s32[1,2,16], index: 0, kind: input, shape index: {}]
  %s1 = inlined_call_operand.vmem [shape: bf16[128,32], index: 1, kind: input, shape index: {}]
  %s2 = inlined_call_operand.vmem [shape: bf16[128,128], index: 2, kind: input, shape index: {}]
  %s3 = inlined_call_operand.vmem [shape: f32[1,128], index: 3, kind: input, shape index: {}]
  %s4 = inlined_call_operand.vmem [shape: f32[16,128], index: 4, kind: input, shape index: {}]
  %s5 = inlined_call_operand.hbm [shape: bf16[128,128], index: 5, kind: input, shape index: {}]
  %s6 = inlined_call_operand.vmem [shape: f32[1,128], index: 6, kind: input, shape index: {}]
  %s7 = inlined_call_operand.hbm [shape: f32[1,2,128], index: 7, kind: output, shape index: {}]
  %s8 = sld [smem:[#allocation0]]
  $region42: #{tpu_custom_call.1} parent=0
    _
  %s10 = ssub.s32 1, %s8
  %s11 = scalar_select 0, %s10, %s8
  $region1: #{tpu_custom_call.1} parent=0
    #allocation2 [shape = 'u8[32768]{0}', space=vmem, size = 0x8000, scoped, tag = 'input window, operand 5, single buffered']
    #allocation3 [shape = 's32[1]{0}', space=sflag, size = 0x4, scoped, tag = 'scoped memory for tpu_custom_call.1']
    #allocation4 [shape = 's32[1]{0}', space=sflag, size = 0x4, scoped, tag = 'scoped memory for tpu_custom_call.1']
    #allocation5 [shape = 'u8[1024]{0}', space=vmem, size = 0x400, scoped, tag = 'output window, operand 0, single buffered']
    %12 = vsyncpa [#allocation3], 0
    %13 = vsyncpa [#allocation4], 0
    // Predicated region
    $region2: #{tpu_custom_call.1} parent=1 // pred_check
      _
    $region3: #{tpu_custom_call.1} parent=1 // pred_check_branch
      %15 = sbr.rel (0) target = $region5
    $region4: #{tpu_custom_call.1} parent=1 // pred_region
      _
    $region5: #{tpu_custom_call.1} parent=1 // pred_fallthru
      _
    // Predicated region
    $region6: #{tpu_custom_call.1} parent=1 // pred_check
      _
    $region7: #{tpu_custom_call.1} parent=1 // pred_check_branch
      %17 = sbr.rel (0) target = $region9
    $region8: #{tpu_custom_call.1} parent=1 // pred_region
      _
    $region9: #{tpu_custom_call.1} parent=1 // pred_fallthru
      _
    // Predicated region
    $region10: #{tpu_custom_call.1} parent=1 // pred_check
      _
    $region11: #{tpu_custom_call.1} parent=1 // pred_check_branch
      %19 = sbr.rel (0) target = $region13
    $region12: #{tpu_custom_call.1} parent=1 // pred_region
      _
    $region13: #{tpu_custom_call.1} parent=1 // pred_fallthru
      _
    // Predicated region
    $region14: #{tpu_custom_call.1} parent=1 // pred_check
      _
    $region15: #{tpu_custom_call.1} parent=1 // pred_check_branch
      %21 = sbr.rel (0) target = $region17
    $region16: #{tpu_custom_call.1} parent=1 // pred_region
      _
    $region17: #{tpu_custom_call.1} parent=1 // pred_fallthru
      _
    // Predicated region
    $region18: #{tpu_custom_call.1} parent=1 // pred_check
      _
    $region19: #{tpu_custom_call.1} parent=1 // pred_check_branch
      %23 = sbr.rel (0) target = $region21
    $region20: #{tpu_custom_call.1} parent=1 // pred_region
      _
    $region21: #{tpu_custom_call.1} parent=1 // pred_fallthru
      _
    // Predicated region
    $region22: #{tpu_custom_call.1} parent=1 // pred_check
      _
    $region23: #{tpu_custom_call.1} parent=1 // pred_check_branch
      %25 = sbr.rel (0) target = $region25
    $region24: #{tpu_custom_call.1} parent=1 // pred_region
      %s27 = ssub.s32 1024, 1024
      %28 = vsyncadd [#allocation3], %s27
      %s29 = sshll.u32 [#allocation2], 4
      %s30 = int_to_ptr.vmem [resolvable:$true] %s29
      %35 = dma.hbm_to_vmem [thread:$0]  %s5, 1024, %s30, [#allocation3], 64, 64, 4
    $region25: #{tpu_custom_call.1} parent=1 // pred_fallthru
      _
    // Predicated region
    $region26: #{tpu_custom_call.1} parent=1 // pred_check
      _
    $region27: #{tpu_custom_call.1} parent=1 // pred_check_branch
      %37 = sbr.rel (0) target = $region29
    $region28: #{tpu_custom_call.1} parent=1 // pred_region
      _
    $region29: #{tpu_custom_call.1} parent=1 // pred_fallthru
      _
    // Predicated region
    $region30: #{tpu_custom_call.1} parent=1 // pred_check
      _
    $region31: #{tpu_custom_call.1} parent=1 // pred_check_branch
      %39 = sbr.rel (0) target = $region33
    $region32: #{tpu_custom_call.1} parent=1 // pred_region
      %40 = dma.done [#allocation3], 1024
    $region33: #{tpu_custom_call.1} parent=1 // pred_fallthru
      _
    %v42 = vld [vmem:[%s0] sm:$0x3]
    %v43 = vlaneseq
    %v44 = vand.u32 %v43, 127
    %v45 = vlaneseq
    %v46 = vshrl.u32 %v45, 7
    %v47 = vsub.s32 0, %v46
    %v48 = vrot.slane %v42, %v47
    %50 = vbcast.lane.b32.xlu0 %v48, 256
    %v51 = vpop.permute.xlu0 %50
    %s53 = sor.u32 256, 8
    %54 = vbcast.lane.b32.xlu0 %v48, %s53
    %v55 = vpop.permute.xlu0 %54
    %v56 = vlaneseq
    %v57 = vshrl.u32 %v56, 7
    %v58 = vsub.s32 1, %v57
    %v59 = vrot.slane %v42, %v58
    %61 = vbcast.lane.b32.xlu0 %v59, 256
    %v62 = vpop.permute.xlu0 %61
    %s64 = sor.u32 256, 8
    %65 = vbcast.lane.b32.xlu0 %v59, %s64
    %v66 = vpop.permute.xlu0 %65
    %vm67 = vcmp.eq.s32.totalorder %v44, %v51
    %vm68 = vcmp.eq.s32.totalorder %v44, %v55
    %vm69 = vcmp.eq.s32.totalorder %v44, %v62
    %vm70 = vcmp.eq.s32.totalorder %v44, %v66
    %v71 = vsel %vm67, 1, 0
    %v72 = vsel %vm68, 1, 0
    %v73 = vsel %vm69, 1, 0
    %v74 = vsel %vm70, 1, 0
    %v75 = vcvt.s32.f32 %v71
    %v76 = vcvt.s32.f32 %v72
    %v77 = vcvt.s32.f32 %v73
    %v78 = vcvt.s32.f32 %v74
    %v79 = vpack.c.bf16 %v76, %v75
    %v80 = vpack.c.bf16 %v78, %v77
    %v81 = vld [vmem:[%s1] sm:$0xf]
    %v82 = vld [vmem:[%s1 + $0x4] sm:$0xf]
    %v83 = vld [vmem:[%s1 + $0x8] sm:$0xf]
    %v84 = vld [vmem:[%s1 + $0xc] sm:$0xf]
    %v85 = vld [vmem:[%s1 + $0x10] sm:$0xf]
    %v86 = vld [vmem:[%s1 + $0x14] sm:$0xf]
    %v87 = vld [vmem:[%s1 + $0x18] sm:$0xf]
    %v88 = vld [vmem:[%s1 + $0x1c] sm:$0xf]
    %v89 = vld [vmem:[%s1 + $0x20] sm:$0xf]
    %v90 = vld [vmem:[%s1 + $0x24] sm:$0xf]
    %v91 = vld [vmem:[%s1 + $0x28] sm:$0xf]
    %v92 = vld [vmem:[%s1 + $0x2c] sm:$0xf]
    %v93 = vld [vmem:[%s1 + $0x30] sm:$0xf]
    %v94 = vld [vmem:[%s1 + $0x34] sm:$0xf]
    %v95 = vld [vmem:[%s1 + $0x38] sm:$0xf]
    %v96 = vld [vmem:[%s1 + $0x3c] sm:$0xf]
    %v113 = vunpack.c.l.b16 %v81
    %v114 = vunpack.c.l.b16 %v82
    %v115 = vunpack.c.l.b16 %v83
    %v116 = vunpack.c.l.b16 %v84
    %v117 = vunpack.c.l.b16 %v85
    %v118 = vunpack.c.l.b16 %v86
    %v119 = vunpack.c.l.b16 %v87
    %v120 = vunpack.c.l.b16 %v88
    %v121 = vunpack.c.l.b16 %v89
    %v122 = vunpack.c.l.b16 %v90
    %v123 = vunpack.c.l.b16 %v91
    %v124 = vunpack.c.l.b16 %v92
    %v125 = vunpack.c.l.b16 %v93
    %v126 = vunpack.c.l.b16 %v94
    %v127 = vunpack.c.l.b16 %v95
    %v128 = vunpack.c.l.b16 %v96
    %v129 = vpack.c.b16 %v114, %v113
    %v130 = vpack.c.b16 %v116, %v115
    %v131 = vpack.c.b16 %v118, %v117
    %v132 = vpack.c.b16 %v120, %v119
    %v133 = vpack.c.b16 %v122, %v121
    %v134 = vpack.c.b16 %v124, %v123
    %v135 = vpack.c.b16 %v126, %v125
    %v136 = vpack.c.b16 %v128, %v127
    %145 = vmatprep.subr.bf16.mxu0 0
    %146 = vmatpush1.bf16.msra.mxu0 %v136
    %147 = vmatprep.subr.bf16.mxu0 0
    %148 = vmatpush1.bf16.msra.mxu0 %v135
    %149 = vmatprep.subr.bf16.mxu0 0
    %150 = vmatpush1.bf16.msra.mxu0 %v134
    %151 = vmatprep.subr.bf16.mxu0 0
    %152 = vmatpush1.bf16.msra.mxu0 %v133
    %153 = vmatprep.subr.bf16.mxu0 0
    %154 = vmatpush1.bf16.msra.mxu0 %v132
    %155 = vmatprep.subr.bf16.mxu0 0
    %156 = vmatpush1.bf16.msra.mxu0 %v131
    %157 = vmatprep.subr.bf16.mxu0 0
    %158 = vmatpush1.bf16.msra.mxu0 %v130
    %159 = vmatprep.subr.bf16.mxu0 0
    %160 = vmatpush1.bf16.msra.mxu0 %v129
    %161 = vmatprep.subr.bf16.mxu0 0
    %162 = vmatpush2.bf16.msra.mxu0 0
    %163 = vmatprep.subr.bf16.mxu0 0
    %164 = vmatpush2.bf16.msra.mxu0 0
    %165 = vmatprep.subr.bf16.mxu0 0
    %166 = vmatpush2.bf16.msra.mxu0 0
    %167 = vmatprep.subr.bf16.mxu0 0
    %168 = vmatpush2.bf16.msra.mxu0 0
    %169 = vmatprep.subr.bf16.mxu0 0
    %170 = vmatpush2.bf16.msra.mxu0 0
    %171 = vmatprep.subr.bf16.mxu0 0
    %172 = vmatpush2.bf16.msra.mxu0 0
    %173 = vmatprep.subr.bf16.mxu0 0
    %174 = vmatpush2.bf16.msra.mxu0 0
    %175 = vmatprep.subr.bf16.mxu0 0
    %176 = vmatpush2.bf16.msra.mxu0 0
    %177 = vmatprep.mubr.bf16.mxu0 0
    %178 = vmatmul.mubr.bf16.gmra.mxu0 %v79
    %v179 = vpop.f32.mrf.mxu0
    %v180 = vadd.f32 0.0, %v179
    %v181 = vpop.f32.mrf.mxu0
    %v182 = vpop.f32.mrf.mxu0
    %v183 = vadd.f32 0.0, %v182
    %v184 = vpop.f32.mrf.mxu0
    %185 = vmatprep.mubr.bf16.mxu0 0
    %186 = vmatmul.mubr.bf16.gmra.mxu0 %v80
    %v187 = vpop.f32.mrf.mxu0
    %v188 = vadd.f32 0.0, %v187
    %v189 = vpop.f32.mrf.mxu0
    %v190 = vpop.f32.mrf.mxu0
    %v191 = vadd.f32 0.0, %v190
    %v192 = vpop.f32.mrf.mxu0
    %193 = vdwg.mxu0
    %v194 = vrot.slane %v180, 1
    %v195 = vrot.slane %v183, 1
    %v196 = vrot.slane %v188, 1
    %v197 = vrot.slane %v191, 1
    %v198 = vlaneseq
    %v199 = vshrl.u32 %v198, 7
    %vm200 = vcmp.lt.s32.totalorder %v199, 7
    %v201 = vsel %vm200, %v196, %v197
    %v202 = vsel %vm200, %v195, %v196
    %v203 = vsel %vm200, %v194, %v195
    %v204 = vsel %vm200, %v197, %v194
    %v205 = vrot.slane %v180, 2
    %v206 = vrot.slane %v183, 2
    %v207 = vrot.slane %v188, 2
    %v208 = vrot.slane %v191, 2
    %vm209 = vcmp.lt.s32.totalorder %v199, 6
    %v210 = vsel %vm209, %v207, %v208
    %v211 = vsel %vm209, %v206, %v207
    %v212 = vsel %vm209, %v205, %v206
    %v213 = vsel %vm209, %v208, %v205
    %v214 = vrot.slane %v180, 3
    %v215 = vrot.slane %v183, 3
    %v216 = vrot.slane %v188, 3
    %v217 = vrot.slane %v191, 3
    %vm218 = vcmp.lt.s32.totalorder %v199, 5
    %v219 = vsel %vm218, %v216, %v217
    %v220 = vsel %vm218, %v215, %v216
    %v221 = vsel %vm218, %v214, %v215
    %v222 = vsel %vm218, %v217, %v214
    %227 = vrot.lane.b32.xlu0 %v203, 32
    %v228 = vpop.permute.xlu0 %227
    %229 = vrot.lane.b32.xlu0 %v202, 32
    %v230 = vpop.permute.xlu0 %229
    %231 = vrot.lane.b32.xlu0 %v201, 32
    %v232 = vpop.permute.xlu0 %231
    %233 = vrot.lane.b32.xlu0 %v204, 32
    %v234 = vpop.permute.xlu0 %233
    %243 = vrot.lane.b32.xlu0 %v212, 64
    %v244 = vpop.permute.xlu0 %243
    %245 = vrot.lane.b32.xlu0 %v211, 64
    %v246 = vpop.permute.xlu0 %245
    %247 = vrot.lane.b32.xlu0 %v210, 64
    %v248 = vpop.permute.xlu0 %247
    %249 = vrot.lane.b32.xlu0 %v213, 64
    %v250 = vpop.permute.xlu0 %249
    %259 = vrot.lane.b32.xlu0 %v221, 96
    %v260 = vpop.permute.xlu0 %259
    %261 = vrot.lane.b32.xlu0 %v220, 96
    %v262 = vpop.permute.xlu0 %261
    %263 = vrot.lane.b32.xlu0 %v219, 96
    %v264 = vpop.permute.xlu0 %263
    %265 = vrot.lane.b32.xlu0 %v222, 96
    %v266 = vpop.permute.xlu0 %265
    %vm271 = vcmask 261120
    %v272 = vsel %vm271, %v180, %v228
    %v273 = vsel %vm271, %v183, %v230
    %v274 = vsel %vm271, %v188, %v232
    %v275 = vsel %vm271, %v191, %v234
    %vm276 = vcmask 523264
    %v277 = vsel %vm276, %v272, %v244
    %v278 = vsel %vm276, %v273, %v246
    %v279 = vsel %vm276, %v274, %v248
    %v280 = vsel %vm276, %v275, %v250
    %vm281 = vcmask 785408
    %v282 = vsel %vm281, %v277, %v260
    %v283 = vsel %vm281, %v278, %v262
    %v284 = vsel %vm281, %v279, %v264
    %v285 = vsel %vm281, %v280, %v266
    %v286 = vpack.c.bf16 %v283, %v282
    %v287 = vpack.c.bf16 %v285, %v284
    %v288 = vld [vmem:[%s2] sm:$0xf]
    %v289 = vld [vmem:[%s2 + $0x4] sm:$0xf]
    %v290 = vld [vmem:[%s2 + $0x8] sm:$0xf]
    %v291 = vld [vmem:[%s2 + $0xc] sm:$0xf]
    %v292 = vld [vmem:[%s2 + $0x10] sm:$0xf]
    %v293 = vld [vmem:[%s2 + $0x14] sm:$0xf]
    %v294 = vld [vmem:[%s2 + $0x18] sm:$0xf]
    %v295 = vld [vmem:[%s2 + $0x1c] sm:$0xf]
    %v296 = vld [vmem:[%s2 + $0x20] sm:$0xf]
    %v297 = vld [vmem:[%s2 + $0x24] sm:$0xf]
    %v298 = vld [vmem:[%s2 + $0x28] sm:$0xf]
    %v299 = vld [vmem:[%s2 + $0x2c] sm:$0xf]
    %v300 = vld [vmem:[%s2 + $0x30] sm:$0xf]
    %v301 = vld [vmem:[%s2 + $0x34] sm:$0xf]
    %v302 = vld [vmem:[%s2 + $0x38] sm:$0xf]
    %v303 = vld [vmem:[%s2 + $0x3c] sm:$0xf]
    %v304 = vld [vmem:[%s3] sm:$0x1]
    %v306 = vlaneseq
    %v307 = vshrl.u32 %v306, 7
    %v308 = vsub.s32 0, %v307
    %v309 = vrot.slane %v304, %v308
    %v327 = vunpack.c.l.b16 %v288
    %v328 = vunpack.c.l.b16 %v289
    %v329 = vunpack.c.l.b16 %v290
    %v330 = vunpack.c.l.b16 %v291
    %v331 = vunpack.c.l.b16 %v292
    %v332 = vunpack.c.l.b16 %v293
    %v333 = vunpack.c.l.b16 %v294
    %v334 = vunpack.c.l.b16 %v295
    %v335 = vunpack.c.l.b16 %v296
    %v336 = vunpack.c.l.b16 %v297
    %v337 = vunpack.c.l.b16 %v298
    %v338 = vunpack.c.l.b16 %v299
    %v339 = vunpack.c.l.b16 %v300
    %v340 = vunpack.c.l.b16 %v301
    %v341 = vunpack.c.l.b16 %v302
    %v342 = vunpack.c.l.b16 %v303
    %v343 = vpack.c.b16 %v328, %v327
    %v344 = vpack.c.b16 %v330, %v329
    %v345 = vpack.c.b16 %v332, %v331
    %v346 = vpack.c.b16 %v334, %v333
    %v347 = vpack.c.b16 %v336, %v335
    %v348 = vpack.c.b16 %v338, %v337
    %v349 = vpack.c.b16 %v340, %v339
    %v350 = vpack.c.b16 %v342, %v341
    %359 = vmatprep.subr.bf16.mxu0 0
    %360 = vmatpush1.bf16.msra.mxu0 %v350
    %361 = vmatprep.subr.bf16.mxu0 0
    %362 = vmatpush1.bf16.msra.mxu0 %v349
    %363 = vmatprep.subr.bf16.mxu0 0
    %364 = vmatpush1.bf16.msra.mxu0 %v348
    %365 = vmatprep.subr.bf16.mxu0 0
    %366 = vmatpush1.bf16.msra.mxu0 %v347
    %367 = vmatprep.subr.bf16.mxu0 0
    %368 = vmatpush1.bf16.msra.mxu0 %v346
    %369 = vmatprep.subr.bf16.mxu0 0
    %370 = vmatpush1.bf16.msra.mxu0 %v345
    %371 = vmatprep.subr.bf16.mxu0 0
    %372 = vmatpush1.bf16.msra.mxu0 %v344
    %373 = vmatprep.subr.bf16.mxu0 0
    %374 = vmatpush1.bf16.msra.mxu0 %v343
    %375 = vmatprep.subr.bf16.mxu0 0
    %376 = vmatpush2.bf16.msra.mxu0 0
    %377 = vmatprep.subr.bf16.mxu0 0
    %378 = vmatpush2.bf16.msra.mxu0 0
    %379 = vmatprep.subr.bf16.mxu0 0
    %380 = vmatpush2.bf16.msra.mxu0 0
    %381 = vmatprep.subr.bf16.mxu0 0
    %382 = vmatpush2.bf16.msra.mxu0 0
    %383 = vmatprep.subr.bf16.mxu0 0
    %384 = vmatpush2.bf16.msra.mxu0 0
    %385 = vmatprep.subr.bf16.mxu0 0
    %386 = vmatpush2.bf16.msra.mxu0 0
    %387 = vmatprep.subr.bf16.mxu0 0
    %388 = vmatpush2.bf16.msra.mxu0 0
    %389 = vmatprep.subr.bf16.mxu0 0
    %390 = vmatpush2.bf16.msra.mxu0 0
    %391 = vmatprep.mubr.bf16.mxu0 0
    %392 = vmatmul.mubr.bf16.gmra.mxu0 %v286
    %v393 = vpop.f32.mrf.mxu0
    %v394 = vadd.f32 %v309, %v393
    %v395 = vpop.f32.mrf.mxu0
    %v396 = vpop.f32.mrf.mxu0
    %v397 = vadd.f32 %v309, %v396
    %v398 = vpop.f32.mrf.mxu0
    %399 = vmatprep.mubr.bf16.mxu0 0
    %400 = vmatmul.mubr.bf16.gmra.mxu0 %v287
    %v401 = vpop.f32.mrf.mxu0
    %v402 = vadd.f32 %v309, %v401
    %v403 = vpop.f32.mrf.mxu0
    %v404 = vpop.f32.mrf.mxu0
    %v405 = vadd.f32 %v309, %v404
    %v406 = vpop.f32.mrf.mxu0
    %407 = vdwg.mxu0
    %v408 = vmax.f32 %v394, 0.0
    %v409 = vmax.f32 %v397, 0.0
    %v410 = vmax.f32 %v402, 0.0
    %v411 = vmax.f32 %v405, 0.0
    %v412 = vld [vmem:[%s4] sm:$0xff]
    %v413 = vld [vmem:[%s4 + $0x8] sm:$0xff]
    %v414 = vmul.f32 %v408, %v412
    %v415 = vmul.f32 %v409, %v413
    %v416 = vmul.f32 %v410, %v412
    %v417 = vmul.f32 %v411, %v413
    %v418 = vmax.f32 %v414, %v415
    %v419 = vrot.slane %v418, 4
    %v420 = vmax.f32 %v418, %v419
    %v421 = vrot.slane %v420, 2
    %v422 = vmax.f32 %v420, %v421
    %v423 = vrot.slane %v422, 1
    %v424 = vmax.f32 %v422, %v423
    %v425 = vmax.f32 %v416, %v417
    %v426 = vrot.slane %v425, 4
    %v427 = vmax.f32 %v425, %v426
    %v428 = vrot.slane %v427, 2
    %v429 = vmax.f32 %v427, %v428
    %v430 = vrot.slane %v429, 1
    %v431 = vmax.f32 %v429, %v430
    %v432 = vpack.c.bf16 %v424, %v424
    %v433 = vpack.c.bf16 %v431, %v431
    %v434 = vld [vmem:[#allocation2] sm:$0xf]
    %v435 = vld [vmem:[#allocation2 + $0x4] sm:$0xf]
    %v436 = vld [vmem:[#allocation2 + $0x8] sm:$0xf]
    %v437 = vld [vmem:[#allocation2 + $0xc] sm:$0xf]
    %v438 = vld [vmem:[#allocation2 + $0x10] sm:$0xf]
    %v439 = vld [vmem:[#allocation2 + $0x14] sm:$0xf]
    %v440 = vld [vmem:[#allocation2 + $0x18] sm:$0xf]
    %v441 = vld [vmem:[#allocation2 + $0x1c] sm:$0xf]
    %v442 = vld [vmem:[#allocation2 + $0x20] sm:$0xf]
    %v443 = vld [vmem:[#allocation2 + $0x24] sm:$0xf]
    %v444 = vld [vmem:[#allocation2 + $0x28] sm:$0xf]
    %v445 = vld [vmem:[#allocation2 + $0x2c] sm:$0xf]
    %v446 = vld [vmem:[#allocation2 + $0x30] sm:$0xf]
    %v447 = vld [vmem:[#allocation2 + $0x34] sm:$0xf]
    %v448 = vld [vmem:[#allocation2 + $0x38] sm:$0xf]
    %v449 = vld [vmem:[#allocation2 + $0x3c] sm:$0xf]
    %v450 = vld [vmem:[%s6] sm:$0x1]
    %v452 = vlaneseq
    %v453 = vshrl.u32 %v452, 7
    %v454 = vsub.s32 0, %v453
    %v455 = vrot.slane %v450, %v454
    %v459 = vunpack.c.l.b16 %v432
    %v460 = vunpack.c.l.b16 %v433
    %vm461 = vcmask 1041409
    %v462 = vsel %vm461, %v460, %v459
    %v463 = vpack.c.b16 %v462, %v462
    %v481 = vunpack.c.l.b16 %v434
    %v482 = vunpack.c.l.b16 %v435
    %v483 = vunpack.c.l.b16 %v436
    %v484 = vunpack.c.l.b16 %v437
    %v485 = vunpack.c.l.b16 %v438
    %v486 = vunpack.c.l.b16 %v439
    %v487 = vunpack.c.l.b16 %v440
    %v488 = vunpack.c.l.b16 %v441
    %v489 = vunpack.c.l.b16 %v442
    %v490 = vunpack.c.l.b16 %v443
    %v491 = vunpack.c.l.b16 %v444
    %v492 = vunpack.c.l.b16 %v445
    %v493 = vunpack.c.l.b16 %v446
    %v494 = vunpack.c.l.b16 %v447
    %v495 = vunpack.c.l.b16 %v448
    %v496 = vunpack.c.l.b16 %v449
    %v497 = vpack.c.b16 %v482, %v481
    %v498 = vpack.c.b16 %v484, %v483
    %v499 = vpack.c.b16 %v486, %v485
    %v500 = vpack.c.b16 %v488, %v487
    %v501 = vpack.c.b16 %v490, %v489
    %v502 = vpack.c.b16 %v492, %v491
    %v503 = vpack.c.b16 %v494, %v493
    %v504 = vpack.c.b16 %v496, %v495
    %513 = vmatprep.subr.bf16.mxu0 0
    %514 = vmatpush1.bf16.msra.mxu0 %v504
    %515 = vmatprep.subr.bf16.mxu0 0
    %516 = vmatpush1.bf16.msra.mxu0 %v503
    %517 = vmatprep.subr.bf16.mxu0 0
    %518 = vmatpush1.bf16.msra.mxu0 %v502
    %519 = vmatprep.subr.bf16.mxu0 0
    %520 = vmatpush1.bf16.msra.mxu0 %v501
    %521 = vmatprep.subr.bf16.mxu0 0
    %522 = vmatpush1.bf16.msra.mxu0 %v500
    %523 = vmatprep.subr.bf16.mxu0 0
    %524 = vmatpush1.bf16.msra.mxu0 %v499
    %525 = vmatprep.subr.bf16.mxu0 0
    %526 = vmatpush1.bf16.msra.mxu0 %v498
    %527 = vmatprep.subr.bf16.mxu0 0
    %528 = vmatpush1.bf16.msra.mxu0 %v497
    %529 = vmatprep.subr.bf16.mxu0 0
    %530 = vmatpush2.bf16.msra.mxu0 0
    %531 = vmatprep.subr.bf16.mxu0 0
    %532 = vmatpush2.bf16.msra.mxu0 0
    %533 = vmatprep.subr.bf16.mxu0 0
    %534 = vmatpush2.bf16.msra.mxu0 0
    %535 = vmatprep.subr.bf16.mxu0 0
    %536 = vmatpush2.bf16.msra.mxu0 0
    %537 = vmatprep.subr.bf16.mxu0 0
    %538 = vmatpush2.bf16.msra.mxu0 0
    %539 = vmatprep.subr.bf16.mxu0 0
    %540 = vmatpush2.bf16.msra.mxu0 0
    %541 = vmatprep.subr.bf16.mxu0 0
    %542 = vmatpush2.bf16.msra.mxu0 0
    %543 = vmatprep.subr.bf16.mxu0 0
    %544 = vmatpush2.bf16.msra.mxu0 0
    %545 = vmatprep.mubr.bf16.mxu0 0
    %546 = vmatmul.mubr.bf16.gmra.mxu0 %v463
    %v547 = vpop.f32.mrf.mxu0
    %v548 = vadd.f32 %v455, %v547
    %v549 = vpop.f32.mrf.mxu0
    %v550 = vpop.f32.mrf.mxu0
    %v551 = vpop.f32.mrf.mxu0
    %552 = vdwg.mxu0
    %553 = vst [vmem:[#allocation5] sm:$0x3] %v548
    // Predicated region
    $region34: #{tpu_custom_call.1} parent=1 // pred_check
      _
    $region35: #{tpu_custom_call.1} parent=1 // pred_check_branch
      %555 = sbr.rel (0) target = $region37
    $region36: #{tpu_custom_call.1} parent=1 // pred_region
      %s557 = ssub.s32 32, 32
      %558 = vsyncadd [#allocation4], %s557
      %s560 = sshll.u32 [#allocation5], 4
      %s561 = int_to_ptr.vmem [resolvable:$true] %s560
      %563 = dma.vmem_to_hbm [thread:$0]  %s561, 32, %s7, [#allocation4]
    $region37: #{tpu_custom_call.1} parent=1 // pred_fallthru
      _
    // Predicated region
    $region38: #{tpu_custom_call.1} parent=1 // pred_check
      _
    $region39: #{tpu_custom_call.1} parent=1 // pred_check_branch
      %565 = sbr.rel (0) target = $region41
    $region40: #{tpu_custom_call.1} parent=1 // pred_region
      %566 = dma.done [#allocation4], 32
    $region41: #{tpu_custom_call.1} parent=1 // pred_fallthru
      _
    %567 = vsyncpa [#allocation3], 1
    %568 = vsyncpa [#allocation4], 1

</llo_original>
